<compile_context>
chip_gen: v5e
topology: v5e:2x2
jax: 0.10.0
libtpu: 0.0.40
codegen_flags: <defaults>
</compile_context>

<pallas_src>
import math

import jax
import jax.numpy as jnp
from jax.experimental import pallas as pl
from jax.experimental.pallas import tpu as pltpu


_LANE = 128
_SUBLANE = 8
_TILE_BYTES = 2 << 20          # ~2 MiB blocks for the pipelined/streamed path
_SINGLE_BLOCK_BYTES = 2 << 20  # below this, one full-array block (no grid overhead)
_VMEM_LIMIT = 32 << 20


# ---------------------------------------------------------------------------
# Backward kernel: o = (-alpha) * g
# ---------------------------------------------------------------------------

def _neg_scale_kernel(neg_alpha_ref, g_ref, o_ref):
    # neg_alpha_ref is a (1,) float32 scalar in SMEM (scalar prefetch).
    o_ref[...] = (g_ref[...] * neg_alpha_ref[0]).astype(o_ref.dtype)


def _launch(arr, block_shape, grid_len, neg_alpha, flops):
    """One pallas_call tiled along axis 0 of `arr` with `block_shape` blocks."""
    ndim = arr.ndim
    itemsize = jnp.dtype(arr.dtype).itemsize

    def idx(i, _neg_a):                       # scalar-prefetch ref is positional
        return (i,) + (0,) * (ndim - 1)

    return pl.pallas_call(
        _neg_scale_kernel,
        out_shape=jax.ShapeDtypeStruct(arr.shape, arr.dtype),
        grid_spec=pltpu.PrefetchScalarGridSpec(
            num_scalar_prefetch=1,
            grid=(grid_len,),
            in_specs=[pl.BlockSpec(block_shape, idx)],
            out_specs=pl.BlockSpec(block_shape, idx),
        ),
        compiler_params=pltpu.CompilerParams(
            dimension_semantics=("parallel",),
            vmem_limit_bytes=_VMEM_LIMIT),
        cost_estimate=pl.CostEstimate(
            flops=flops, transcendentals=0,
            bytes_accessed=2 * arr.size * itemsize + 4),
    )(neg_alpha, arr)


def _choose_lane_width(size):
    for c in (4096, 2048, 1024, 512, 256, 128):
        if size % c == 0:
            return c
    return None


def _neg_scale_pallas(g, alpha):
    """Compute -alpha * g with a tiled, pipelined Pallas kernel."""
    orig_shape = g.shape
    orig_dtype = g.dtype
    n = g.size
    if n == 0:
        return g

    itemsize = jnp.dtype(orig_dtype).itemsize
    total_bytes = n * itemsize
    # -alpha precomputed in float32 (never cast down to the gradient dtype).
    neg_alpha = (-jnp.asarray(alpha, dtype=jnp.float32)).reshape((1,))

    # --- Lane-dense streamed path (element count divisible by 128) ----------
    if n % _LANE == 0:
        lane_w = _choose_lane_width(n)
        rows = n // lane_w
        arr = g.reshape(rows, lane_w)
        if total_bytes <= _SINGLE_BLOCK_BYTES:
            tile_rows, grid_len = rows, 1
        else:
            tile_rows = max(_SUBLANE,
                            (_TILE_BYTES // (lane_w * itemsize))
                            // _SUBLANE * _SUBLANE)
            tile_rows = min(tile_rows, rows)          # full extent if rows smaller
            grid_len = pl.cdiv(rows, tile_rows)       # partial last block is fine
        out = _launch(arr, (tile_rows, lane_w), grid_len, neg_alpha, n)
        return out.reshape(orig_shape)

    # --- Non-128-aligned: keep original layout, no pad/slice copies ---------
    arr = g if g.ndim >= 2 else g.reshape(1, -1)      # 0-D -> (1,1), 1-D -> (1,N)
    shape = arr.shape
    trailing_bytes = math.prod(shape[1:]) * itemsize

    if total_bytes <= _SINGLE_BLOCK_BYTES:
        # Single full-array block (block dims == array dims: always legal).
        out = _launch(arr, shape, 1, neg_alpha, n)
        return out.reshape(orig_shape)

    if trailing_bytes <= _TILE_BYTES:
        # Tile only the leading dim; trailing dims stay full-extent (legal).
        tile_lead = max(1, _TILE_BYTES // trailing_bytes)
        if arr.ndim == 2:
            # leading dim is the sublane dim -> multiple of 8 (or full extent)
            tile_lead = max(_SUBLANE, tile_lead // _SUBLANE * _SUBLANE)
        tile_lead = min(tile_lead, shape[0])
        grid_len = pl.cdiv(shape[0], tile_lead)
        out = _launch(arr, (tile_lead,) + shape[1:], grid_len, neg_alpha, n)
        return out.reshape(orig_shape)

    # --- Pathological fallback (huge, non-aligned, untileable trailing) -----
    padded = ((n + _SUBLANE * _LANE - 1) // (_SUBLANE * _LANE)) * (_SUBLANE * _LANE)
    flat = jnp.pad(g.reshape(-1), (0, padded - n))
    lane_w = _choose_lane_width(padded)
    rows = padded // lane_w
    tile_rows = max(_SUBLANE,
                    (_TILE_BYTES // (lane_w * itemsize)) // _SUBLANE * _SUBLANE)
    tile_rows = min(tile_rows, rows)
    grid_len = pl.cdiv(rows, tile_rows)
    out = _launch(flat.reshape(rows, lane_w), (tile_rows, lane_w),
                  grid_len, neg_alpha, padded)
    return out.reshape(-1)[:n].reshape(orig_shape)


# ---------------------------------------------------------------------------
# GradientReversal module equivalent (custom_vjp)
# ---------------------------------------------------------------------------

@jax.custom_vjp
def revgrad(x, alpha):
    # Forward is an exact identity: no Pallas kernel, no extra HBM traffic.
    return x


def _revgrad_fwd(x, alpha):
    return x, alpha


def _revgrad_bwd(alpha, g):
    # d/dx = -alpha * g (Pallas kernel); alpha gets a zero cotangent
    # (matches requires_grad=False on the PyTorch buffer).
    return _neg_scale_pallas(g, alpha), jnp.zeros_like(alpha)


revgrad.defvjp(_revgrad_fwd, _revgrad_bwd)


class GradientReversal:
    """JAX/Pallas equivalent of the PyTorch GradientReversal module."""

    def __init__(self, alpha):
        # deterministic, parameter-free module; alpha is a fixed scalar
        self.alpha = jnp.asarray(alpha, dtype=jnp.float32)

    def __call__(self, x):
        return revgrad(x, self.alpha)


# ---------------------------------------------------------------------------
# Demo / smoke test
# ---------------------------------------------------------------------------

if __name__ == "__main__":
    key = jax.random.PRNGKey(0)
    k1, k2, k3, k4, k5 = jax.random.split(key, 5)

    ALPHA = 1.5
    grl = GradientReversal(alpha=ALPHA)

    def check(x):
        # forward must be an exact identity
        y = jax.block_until_ready(grl(x))
        assert y.shape == x.shape and y.dtype == x.dtype
        assert bool(jnp.all(y == x))
        # grad of sum(y) w.r.t. x must be -alpha everywhere
        g = jax.block_until_ready(
            jax.grad(lambda v: jnp.sum(grl(v).astype(jnp.float32)))(x))
        assert g.shape == x.shape and g.dtype == x.dtype
        assert bool(jnp.allclose(g.astype(jnp.float32), -ALPHA, rtol=1e-2))

    # 1) small NCHW feature map (single-block lane-dense path)
    check(jax.random.normal(k1, (2, 4, 16, 16), dtype=jnp.float32))

    # 2) larger map -> gridded lane-dense path, "parallel" row axis (even grid)
    check(jax.random.normal(k2, (8, 16, 64, 64), dtype=jnp.float32))

    # 3) gridded lane-dense path with a partial trailing row block
    check(jax.random.normal(k3, (10, 16, 64, 64), dtype=jnp.float32))

    # 4) small non-128-aligned element count -> original-layout single block
    check(jax.random.normal(k4, (3, 5, 7), dtype=jnp.float32))

    # 5) larger non-128-aligned count -> leading-dim-tiled, no pad/slice copies
    check(jax.random.normal(k5, (12, 7, 100, 100), dtype=jnp.float32))

    # 6) bf16 gradients: alpha stays f32 in SMEM, product cast back to bf16
    check(jax.random.normal(k1, (2, 4, 16, 16), dtype=jnp.float32)
          .astype(jnp.bfloat16))

    print("KERNEL_OK")
</pallas_src>

<mosaic_0001>
module attributes {stable_mosaic.version = 11 : i64} {
  func.func @_neg_scale_kernel(%arg0: i32, %arg1: memref<1xf32, #tpu.memory_space<smem>>, %arg2: memref<1x2048xf32, #tpu.memory_space<vmem>>, %arg3: memref<1x2048xf32, #tpu.memory_space<vmem>>) attributes {dimension_semantics = [#tpu.dimension_semantics<parallel>], iteration_bounds = array<i64: 1>, scalar_prefetch = 1 : i64, scratch_operands = 0 : i64, tpu.core_type = #tpu.core_type<tc>, window_params = [{transform_indices = @transform_0, window_bounds = array<i64: 1, 2048>}, {transform_indices = @transform_1, window_bounds = array<i64: 1, 2048>}]} {
    %c0 = arith.constant 0 : index
    %c0_0 = arith.constant 0 : index
    %0 = vector.load %arg2[%c0, %c0_0] : memref<1x2048xf32, #tpu.memory_space<vmem>>, vector<1x2048xf32>
    %c0_1 = arith.constant 0 : index
    %1 = memref.load %arg1[%c0_1] : memref<1xf32, #tpu.memory_space<smem>>
    %2 = vector.broadcast %1 : f32 to vector<1x2048xf32>
    %3 = arith.mulf %0, %2 : vector<1x2048xf32>
    %c0_2 = arith.constant 0 : index
    %c0_3 = arith.constant 0 : index
    %4 = vector.load %arg3[%c0_2, %c0_3] : memref<1x2048xf32, #tpu.memory_space<vmem>>, vector<1x2048xf32>
    tpu.vector_store %arg3[%c0_2, %c0_3], %3 {strides = array<i32>} : memref<1x2048xf32, #tpu.memory_space<vmem>>, vector<1x2048xf32>,
    return
  }
  func.func @transform_0(%arg0: i32, %arg1: memref<1xf32, #tpu.memory_space<smem>>) -> (i32, i32) {
    %c0_i32 = arith.constant 0 : i32
    %c0_i32_0 = arith.constant 0 : i32
    return %arg0, %c0_i32 : i32, i32
  }
  func.func @transform_1(%arg0: i32, %arg1: memref<1xf32, #tpu.memory_space<smem>>) -> (i32, i32) {
    %c0_i32 = arith.constant 0 : i32
    %c0_i32_0 = arith.constant 0 : i32
    return %arg0, %c0_i32 : i32, i32
  }
}

</mosaic_0001>

<llo_original>
// kernel: tpu_custom_call.1
$region0: #{tpu_custom_call.1}
  #allocation0 [shape = 'u32[]', space=smem, size = 0x4, offset = 0x4, fixed_abs, tag = 'smem constant byte address 0x4 - core index']
  #allocation1 [shape = 'u32[72,128]{1,0:T(1,128)}', space=vmem, size = 0x9000, scoped, tag = 'internal scratch']
  #allocation2 [shape = 's32[1]{0}', space=sflag, size = 0x4, scoped, tag = 'scoped memory for tpu_custom_call.1']
  #allocation3 [shape = 'f32[1]{0:T(128)S(6)}', space=smem, size = 0x200, scoped, tag = 'prefetched SMEM operand 0']
  %s0 = inlined_call_operand.<no memory space> [shape: f32[1], index: 0, kind: input, shape index: {}]
  %s1 = inlined_call_operand.hbm [shape: f32[1,2048], index: 1, kind: input, shape index: {}]
  %s2 = inlined_call_operand.hbm [shape: f32[1,2048], index: 2, kind: output, shape index: {}]
  %s3 = sld [smem:[#allocation0]]
  $region18: #{tpu_custom_call.1} parent=0
    _
  %s5 = ssub.s32 1, %s3
  %s6 = scalar_select 0, %s5, %s3
  %7 = sst [smem:[#allocation3]] %s0
  $region1: #{tpu_custom_call.1} parent=0
    #allocation4 [shape = 'u8[8192]{0}', space=vmem, size = 0x2000, scoped, tag = 'input window, operand 1, single buffered']
    #allocation5 [shape = 's32[1]{0}', space=sflag, size = 0x4, scoped, tag = 'scoped memory for tpu_custom_call.1']
    #allocation6 [shape = 's32[1]{0}', space=sflag, size = 0x4, scoped, tag = 'scoped memory for tpu_custom_call.1']
    #allocation7 [shape = 'u8[8192]{0}', space=vmem, size = 0x2000, scoped, tag = 'output window, operand 0, single buffered']
    %8 = vsyncpa [#allocation5], 0
    %9 = vsyncpa [#allocation6], 0
    // Predicated region
    $region2: #{tpu_custom_call.1} parent=1 // pred_check
      _
    $region3: #{tpu_custom_call.1} parent=1 // pred_check_branch
      %11 = sbr.rel (0) target = $region5
    $region4: #{tpu_custom_call.1} parent=1 // pred_region
      %13 = vsyncadd [#allocation5], 0
      %s15 = sshll.u32 %s1, 4
      %s16 = int_to_ptr.hbm [resolvable:$true] %s15
      %s17 = sshll.u32 [#allocation4], 4
      %s18 = int_to_ptr.vmem [resolvable:$true] %s17
      %20 = dma.hbm_to_vmem [thread:$0]  %s16, 256, %s18, [#allocation5]
    $region5: #{tpu_custom_call.1} parent=1 // pred_fallthru
      _
    // Predicated region
    $region6: #{tpu_custom_call.1} parent=1 // pred_check
      _
    $region7: #{tpu_custom_call.1} parent=1 // pred_check_branch
      %22 = sbr.rel (0) target = $region9
    $region8: #{tpu_custom_call.1} parent=1 // pred_region
      %24 = dma.done [#allocation5], 256
    $region9: #{tpu_custom_call.1} parent=1 // pred_fallthru
      _
    %v25 = vld [vmem:[#allocation4] sm:$0xff]
    %v26 = vld [vmem:[#allocation4 + $0x8] sm:$0xff]
    %s27 = sld [smem:[#allocation3]]
    %v28 = vstv %s27
    %v29 = vmul.f32 %v25, %v28
    %v30 = vmul.f32 %v26, %v28
    %31 = vst [vmem:[#allocation7] sm:$0xff] %v29
    %32 = vst [vmem:[#allocation7 + $0x8] sm:$0xff] %v30
    // Predicated region
    $region10: #{tpu_custom_call.1} parent=1 // pred_check
      _
    $region11: #{tpu_custom_call.1} parent=1 // pred_check_branch
      %34 = sbr.rel (0) target = $region13
    $region12: #{tpu_custom_call.1} parent=1 // pred_region
      %36 = vsyncadd [#allocation6], 0
      %s38 = sshll.u32 [#allocation7], 4
      %s39 = int_to_ptr.vmem [resolvable:$true] %s38
      %s40 = sshll.u32 %s2, 4
      %s41 = int_to_ptr.hbm [resolvable:$true] %s40
      %43 = dma.vmem_to_hbm [thread:$0]  %s39, 256, %s41, [#allocation6]
    $region13: #{tpu_custom_call.1} parent=1 // pred_fallthru
      _
    // Predicated region
    $region14: #{tpu_custom_call.1} parent=1 // pred_check
      _
    $region15: #{tpu_custom_call.1} parent=1 // pred_check_branch
      %45 = sbr.rel (0) target = $region17
    $region16: #{tpu_custom_call.1} parent=1 // pred_region
      %47 = dma.done [#allocation6], 256
    $region17: #{tpu_custom_call.1} parent=1 // pred_fallthru
      _
    %48 = vsyncpa [#allocation5], 1
    %49 = vsyncpa [#allocation6], 1

</llo_original>
